<compile_context>
chip_gen: v5e
topology: v5e:2x2
jax: 0.10.0
libtpu: 0.0.40
codegen_flags: <defaults>
</compile_context>

<pallas_src>
import jax
import jax.numpy as jnp
from jax.experimental import pallas as pl
from jax.experimental.pallas import tpu as pltpu


def _round_up(x: int, m: int) -> int:
    return ((x + m - 1) // m) * m


def _pick_batch_tile(batch: int, requested: int | None) -> int:
    if requested is None:
        # <= 256 rows per tile; >= 2 grid steps when the batch allows it so the
        # "parallel" axis can be split across v7x's two TensorCores.
        tile = min(256, _round_up(pl.cdiv(batch, 2), 8))
    else:
        tile = requested
    tile = max(1, min(tile, batch))
    # Block sublane dim must be a multiple of 8 or equal the full batch dim.
    if tile != batch:
        tile = _round_up(tile, 8)
        if tile >= batch:
            tile = batch
    return tile


def _vmem_limit(num_maps: int, embed_dim: int, batch_tile: int,
                itemsize: int, table_bufs: int) -> int:
    pm = _round_up(num_maps, 8)
    pd = _round_up(embed_dim, 128)
    pt = _round_up(batch_tile, 8)
    table_b = pm * pd * itemsize            # resident table (x table_bufs)
    out_b = pt * pd * itemsize              # output block (double-buffered)
    idx_b = pt * 128 * 4                    # lane-padded int32 index column
    limit = table_bufs * table_b + 2 * (out_b + idx_b) + (2 << 20)  # + slack
    # Clamp to something that fits every generation's physical VMEM (v7x: 64 MiB).
    return int(min(max(limit, 4 << 20), 64 << 20))


# ---------------------------------------------------------------------------
# Kernel bodies
# ---------------------------------------------------------------------------
def _take_gather_kernel(idx_ref, table_ref, out_ref):
    """Vectorized true gather of table rows (no MXU, bit-exact)."""
    num_maps = table_ref.shape[0]
    idx = idx_ref[...][:, 0].astype(jnp.int32)            # (bt,)
    idx = jnp.clip(idx, 0, num_maps - 1)                   # torch would raise; we clamp
    out_ref[...] = jnp.take(table_ref[...], idx, axis=0).astype(out_ref.dtype)


def _make_loop_gather_kernel(batch: int, batch_tile: int):
    """Fallback true gather: per-row dynamic-index copy from the resident table."""
    def kernel(idx_sref, table_ref, out_ref):
        num_maps = table_ref.shape[0]
        base = pl.program_id(0) * batch_tile

        def body(i, carry):
            j = jnp.minimum(base + i, batch - 1)            # clamp padded tail rows
            row = jnp.clip(idx_sref[j], 0, num_maps - 1)
            out_ref[pl.ds(i, 1), :] = table_ref[pl.ds(row, 1), :]
            return carry

        jax.lax.fori_loop(0, batch_tile, body, 0, unroll=False)
    return kernel


def _onehot_gather_kernel(idx_ref, table_ref, out_ref):
    """Last-resort gather via one-hot x table MXU matmul (HIGHEST precision)."""
    idx = idx_ref[...].astype(jnp.int32)                    # (bt, 1)
    bt = idx.shape[0]
    num_maps = table_ref.shape[0]
    iota = jax.lax.broadcasted_iota(jnp.int32, (bt, num_maps), 1)
    one_hot = (iota == idx).astype(table_ref.dtype)
    out_ref[...] = jnp.dot(
        one_hot, table_ref[...],
        precision=jax.lax.Precision.HIGHEST,
        preferred_element_type=jnp.float32,
    ).astype(out_ref.dtype)


# ---------------------------------------------------------------------------
# pallas_call builders
# ---------------------------------------------------------------------------
def _pallas_resident_table(kernel_fn, indices, table, batch_tile, single_buffer_table):
    batch = indices.shape[0]
    num_maps, embed_dim = table.shape
    itemsize = jnp.dtype(table.dtype).itemsize
    grid = (pl.cdiv(batch, batch_tile),)
    idx2d = indices.reshape(batch, 1)

    if single_buffer_table:
        # Constant index_map -> fetched once; single buffer halves its footprint.
        table_spec = pl.BlockSpec((num_maps, embed_dim), lambda b: (0, 0),
                                  pipeline_mode=pl.Buffered(1))
        table_bufs = 1
    else:
        table_spec = pl.BlockSpec((num_maps, embed_dim), lambda b: (0, 0))
        table_bufs = 2

    return pl.pallas_call(
        kernel_fn,
        out_shape=jax.ShapeDtypeStruct((batch, embed_dim), table.dtype),
        grid_spec=pltpu.PrefetchScalarGridSpec(
            num_scalar_prefetch=0,
            grid=grid,
            in_specs=[
                pl.BlockSpec((batch_tile, 1), lambda b: (b, 0)),   # per-tile ids
                table_spec,                                        # resident table
            ],
            out_specs=pl.BlockSpec((batch_tile, embed_dim), lambda b: (b, 0)),
        ),
        compiler_params=pltpu.CompilerParams(
            dimension_semantics=("parallel",),  # independent batch tiles
            vmem_limit_bytes=_vmem_limit(num_maps, embed_dim, batch_tile,
                                         itemsize, table_bufs),
        ),
    )(idx2d, table)


def _pallas_loop_gather(indices, table, batch_tile):
    batch = indices.shape[0]
    num_maps, embed_dim = table.shape
    itemsize = jnp.dtype(table.dtype).itemsize
    grid = (pl.cdiv(batch, batch_tile),)

    return pl.pallas_call(
        _make_loop_gather_kernel(batch, batch_tile),
        out_shape=jax.ShapeDtypeStruct((batch, embed_dim), table.dtype),
        grid_spec=pltpu.PrefetchScalarGridSpec(
            num_scalar_prefetch=1,                              # indices -> SMEM
            grid=grid,
            in_specs=[pl.BlockSpec((num_maps, embed_dim), lambda b, idx: (0, 0))],
            out_specs=pl.BlockSpec((batch_tile, embed_dim), lambda b, idx: (b, 0)),
        ),
        compiler_params=pltpu.CompilerParams(
            dimension_semantics=("parallel",),
            vmem_limit_bytes=_vmem_limit(num_maps, embed_dim, batch_tile,
                                         itemsize, 2),
        ),
    )(indices, table)


# ---------------------------------------------------------------------------
# Public forward
# ---------------------------------------------------------------------------
_PATH_CACHE: dict = {}


def map_embedding_forward(indices: jax.Array, table: jax.Array, *,
                          batch_tile: int | None = None,
                          use_pallas: bool | None = None) -> jax.Array:
    """Pallas equivalent of MapEmbedding.forward (eval mode: dropout = identity)."""
    indices = jnp.asarray(indices).astype(jnp.int32)
    table = jnp.asarray(table)
    batch = indices.shape[0]
    num_maps, embed_dim = table.shape
    itemsize = jnp.dtype(table.dtype).itemsize

    if use_pallas is None:
        # Tiny problems: pallas_call fixed cost + per-step overhead dominate;
        # the fused XLA gather is strictly faster there.
        use_pallas = (batch > 512) or (num_maps * embed_dim * itemsize > (256 << 10))
    if not use_pallas:
        return jnp.take(table, jnp.clip(indices, 0, num_maps - 1), axis=0)

    tile = _pick_batch_tile(batch, batch_tile)

    attempts = (
        lambda: _pallas_resident_table(_take_gather_kernel, indices, table, tile, True),
        lambda: _pallas_resident_table(_take_gather_kernel, indices, table, tile, False),
        lambda: _pallas_loop_gather(indices, table, tile),
        lambda: _pallas_resident_table(_onehot_gather_kernel, indices, table, tile, False),
    )
    cache_key = (batch, num_maps, embed_dim, str(table.dtype), tile)
    start = _PATH_CACHE.get(cache_key, 0)
    last_err = None
    for i in range(start, len(attempts)):
        try:
            out = jax.block_until_ready(attempts[i]())
            _PATH_CACHE[cache_key] = i
            return out
        except Exception as err:   # lowering/compile rejection -> next fallback
            last_err = err
    raise last_err


if __name__ == "__main__":
    key = jax.random.PRNGKey(0)
    k_tab, k_idx = jax.random.split(key)

    num_maps = 16
    embed_dim = 128
    batch = 8

    # nn.Embedding default init: N(0, 1)
    table = jax.random.normal(k_tab, (num_maps, embed_dim), dtype=jnp.float32)
    indices = jax.random.randint(k_idx, (batch,), 0, num_maps, dtype=jnp.int32)

    # Force the Pallas path so the kernel is exercised at demo sizes.
    out = map_embedding_forward(indices, table, use_pallas=True)
    out = jax.block_until_ready(out)

    # Reference: plain gather (dropout is identity in eval mode).
    ref = jnp.take(table, indices, axis=0)
    assert out.shape == (batch, embed_dim)
    assert jnp.allclose(out, ref), "Pallas embedding gather mismatch"

    print("KERNEL_OK")
</pallas_src>

<mosaic_0001>
module attributes {stable_mosaic.version = 11 : i64} {
  func.func @kernel(%arg0: i32, %arg1: memref<8xi32, #tpu.memory_space<smem>>, %arg2: memref<16x128xf32, #tpu.memory_space<vmem>>, %arg3: memref<8x128xf32, #tpu.memory_space<vmem>>) attributes {dimension_semantics = [#tpu.dimension_semantics<parallel>], iteration_bounds = array<i64: 1>, scalar_prefetch = 1 : i64, scratch_operands = 0 : i64, tpu.core_type = #tpu.core_type<tc>, window_params = [{pipeline_mode = #tpu.pipeline_mode<synchronous>, transform_indices = @transform_0, window_bounds = array<i64: 16, 128>}, {transform_indices = @transform_1, window_bounds = array<i64: 8, 128>}]} {
    %c8_i32 = arith.constant 8 : i32
    %0 = arith.muli %arg0, %c8_i32 : i32
    %c0_i32 = arith.constant 0 : i32
    %c8_i32_0 = arith.constant 8 : i32
    %1 = arith.addi %c0_i32, %c8_i32_0 : i32
    %c1_i32 = arith.constant 1 : i32
    scf.for %arg4 = %c0_i32 to %1 step %c1_i32  : i32 {
      %2 = arith.addi %0, %arg4 : i32
      %c7_i32 = arith.constant 7 : i32
      %3 = arith.minsi %2, %c7_i32 : i32
      %4 = arith.index_cast %3 : i32 to index
      %5 = memref.load %arg1[%4] : memref<8xi32, #tpu.memory_space<smem>>
      %c0_i32_2 = arith.constant 0 : i32
      %c15_i32 = arith.constant 15 : i32
      %6 = arith.maxsi %c0_i32_2, %5 : i32
      %7 = arith.minsi %c15_i32, %6 : i32
      %8 = arith.index_cast %7 : i32 to index
      %c0 = arith.constant 0 : index
      %9 = vector.load %arg2[%8, %c0] : memref<16x128xf32, #tpu.memory_space<vmem>>, vector<1x128xf32>
      %10 = arith.index_cast %arg4 : i32 to index
      %c0_3 = arith.constant 0 : index
      %11 = vector.load %arg3[%10, %c0_3] : memref<8x128xf32, #tpu.memory_space<vmem>>, vector<1x128xf32>
      tpu.vector_store %arg3[%10, %c0_3], %9 {strides = array<i32>} : memref<8x128xf32, #tpu.memory_space<vmem>>, vector<1x128xf32>,
    }
    %c8_i32_1 = arith.constant 8 : i32
    return
  }
  func.func @transform_0(%arg0: i32, %arg1: memref<8xi32, #tpu.memory_space<smem>>) -> (i32, i32) {
    %c0_i32 = arith.constant 0 : i32
    %c0_i32_0 = arith.constant 0 : i32
    %c0_i32_1 = arith.constant 0 : i32
    return %c0_i32, %c0_i32_0 : i32, i32
  }
  func.func @transform_1(%arg0: i32, %arg1: memref<8xi32, #tpu.memory_space<smem>>) -> (i32, i32) {
    %c0_i32 = arith.constant 0 : i32
    %c0_i32_0 = arith.constant 0 : i32
    return %arg0, %c0_i32 : i32, i32
  }
}

module attributes {stable_mosaic.version = 11 : i64} {
  func.func @_onehot_gather_kernel(%arg0: i32, %arg1: memref<8x1xi32, #tpu.memory_space<vmem>>, %arg2: memref<16x128xf32, #tpu.memory_space<vmem>>, %arg3: memref<8x128xf32, #tpu.memory_space<vmem>>) attributes {dimension_semantics = [#tpu.dimension_semantics<parallel>], iteration_bounds = array<i64: 1>, scalar_prefetch = 0 : i64, scratch_operands = 0 : i64, tpu.core_type = #tpu.core_type<tc>, window_params = [{transform_indices = @transform_0, window_bounds = array<i64: 8, 1>}, {pipeline_mode = #tpu.pipeline_mode<synchronous>, transform_indices = @transform_1, window_bounds = array<i64: 16, 128>}, {transform_indices = @transform_2, window_bounds = array<i64: 8, 128>}]} {
    %c0 = arith.constant 0 : index
    %c0_0 = arith.constant 0 : index
    %0 = vector.load %arg1[%c0, %c0_0] : memref<8x1xi32, #tpu.memory_space<vmem>>, vector<8x1xi32>
    %1 = tpu.iota {dimensions = array<i32: 1>} : vector<8x16xi32>
    %2 = vector.broadcast %0 : vector<8x1xi32> to vector<8x16xi32>
    %3 = arith.cmpi eq, %1, %2 : vector<8x16xi32>
    %4 = arith.extui %3 : vector<8x16xi1> to vector<8x16xi32>
    %5 = arith.sitofp %4 : vector<8x16xi32> to vector<8x16xf32>
    %c0_1 = arith.constant 0 : index
    %c0_2 = arith.constant 0 : index
    %6 = vector.load %arg2[%c0_1, %c0_2] : memref<16x128xf32, #tpu.memory_space<vmem>>, vector<16x128xf32>
    %cst = arith.constant dense<0.000000e+00> : vector<8x128xf32>
    %7 = tpu.matmul %5, %6, %cst {dimension_numbers = #tpu.dot_dimension_numbers<[1], [0], [0], [1], [0, 0, 1, 1], [], []>, precision = #tpu.contract_precision<fp32>} : vector<8x16xf32>, vector<16x128xf32>, vector<8x128xf32> -> vector<8x128xf32>
    %c0_3 = arith.constant 0 : index
    %c0_4 = arith.constant 0 : index
    %8 = vector.load %arg3[%c0_3, %c0_4] : memref<8x128xf32, #tpu.memory_space<vmem>>, vector<8x128xf32>
    tpu.vector_store %arg3[%c0_3, %c0_4], %7 {strides = array<i32>} : memref<8x128xf32, #tpu.memory_space<vmem>>, vector<8x128xf32>,
    return
  }
  func.func @transform_0(%arg0: i32) -> (i32, i32) {
    %c0_i32 = arith.constant 0 : i32
    %c0_i32_0 = arith.constant 0 : i32
    return %arg0, %c0_i32 : i32, i32
  }
  func.func @transform_1(%arg0: i32) -> (i32, i32) {
    %c0_i32 = arith.constant 0 : i32
    %c0_i32_0 = arith.constant 0 : i32
    %c0_i32_1 = arith.constant 0 : i32
    return %c0_i32, %c0_i32_0 : i32, i32
  }
  func.func @transform_2(%arg0: i32) -> (i32, i32) {
    %c0_i32 = arith.constant 0 : i32
    %c0_i32_0 = arith.constant 0 : i32
    return %arg0, %c0_i32 : i32, i32
  }
}

</mosaic_0001>

<llo_original>
// kernel: tpu_custom_call.1
$region0: #{tpu_custom_call.1}
  #allocation0 [shape = 'u32[]', space=smem, size = 0x4, offset = 0x4, fixed_abs, tag = 'smem constant byte address 0x4 - core index']
  #allocation1 [shape = 'u32[72,128]{1,0:T(1,128)}', space=vmem, size = 0x9000, scoped, tag = 'internal scratch']
  #allocation2 [shape = 's32[1]{0}', space=sflag, size = 0x4, scoped, tag = 'scoped memory for tpu_custom_call.1']
  #allocation3 [shape = 'u8[512]{0}', space=smem, size = 0x200, scoped, tag = 'prefetched SMEM operand 0']
  %s0 = inlined_call_operand.hbm [shape: s32[8], index: 0, kind: input, shape index: {}]
  %s1 = inlined_call_operand.hbm [shape: f32[16,128], index: 1, kind: input, shape index: {}]
  %s2 = inlined_call_operand.hbm [shape: f32[8,128], index: 2, kind: output, shape index: {}]
  %s3 = sld [smem:[#allocation0]]
  $region25: #{tpu_custom_call.1} parent=0
    _
  %s5 = ssub.s32 1, %s3
  %s6 = scalar_select 0, %s5, %s3
  %s8 = sshll.u32 %s0, 4
  %s9 = int_to_ptr.hbm [resolvable:$true] %s8
  %11 = dma.hbm_to_smem %s9, 16, [#allocation3], [#allocation2]
  %13 = dma.done [#allocation2], 16
  %14 = sfence
  $region1: #{tpu_custom_call.1} parent=0
    #allocation4 [shape = 'u8[8192]{0}', space=vmem, size = 0x2000, scoped, tag = 'input window, operand 1, single buffered']
    #allocation5 [shape = 's32[1]{0}', space=sflag, size = 0x4, scoped, tag = 'scoped memory for tpu_custom_call.1']
    #allocation6 [shape = 's32[1]{0}', space=sflag, size = 0x4, scoped, tag = 'scoped memory for tpu_custom_call.1']
    #allocation7 [shape = 'u8[4096]{0}', space=vmem, size = 0x1000, scoped, tag = 'output window, operand 0, single buffered']
    %15 = vsyncpa [#allocation5], 0
    %16 = vsyncpa [#allocation6], 0
    // Predicated region
    $region2: #{tpu_custom_call.1} parent=1 // pred_check
      _
    $region3: #{tpu_custom_call.1} parent=1 // pred_check_branch
      %18 = sbr.rel (0) target = $region5
    $region4: #{tpu_custom_call.1} parent=1 // pred_region
      %20 = vsyncadd [#allocation5], 0
      %s21 = sshll.u32 %s1, 4
      %s22 = int_to_ptr.hbm [resolvable:$true] %s21
      %s23 = sshll.u32 [#allocation4], 4
      %s24 = int_to_ptr.vmem [resolvable:$true] %s23
      %29 = dma.hbm_to_vmem [thread:$0]  %s22, 256, %s24, [#allocation5], 128, 128, 8
    $region5: #{tpu_custom_call.1} parent=1 // pred_fallthru
      _
    // Predicated region
    $region6: #{tpu_custom_call.1} parent=1 // pred_check
      _
    $region7: #{tpu_custom_call.1} parent=1 // pred_check_branch
      %31 = sbr.rel (0) target = $region9
    $region8: #{tpu_custom_call.1} parent=1 // pred_region
      %33 = dma.done [#allocation5], 256
    $region9: #{tpu_custom_call.1} parent=1 // pred_fallthru
      _
    %s34 = smul.u32 0, 8
    loop: start=0, step=1, limit=8
    $region10: #{tpu_custom_call.1} parent=1 // loop_pre_header
      _
    $region11: #{tpu_custom_call.1} parent=1 // loop_header
      %s36 = sphi 0, %s40
      %p37 = scmp.ge.s32.totalorder %s36, 8
    $region12: #{tpu_custom_call.1} parent=1 // loop_header_branch
      %39 = sbr.rel (%p37) target = $region16
    $region13: #{tpu_custom_call.1} parent=1 // loop_body
      %s41 = sadd.s32 %s34, %s36
      %p42 = scmp.lt.s32.totalorder %s41, 7
      %s43 = scalar_select %p42, %s41, 7
      %s44 = sld [smem:[#allocation3 + %s43]]
      %p45 = scmp.gt.s32.totalorder %s44, 0
      %s46 = scalar_select %p45, %s44, 0
      %p47 = scmp.lt.s32.totalorder %s46, 15
      %s48 = scalar_select %p47, %s46, 15
      %s49 = scalar_lea.vmem [#allocation4], %s48
      %v50 = vld [vmem:[%s49] sm:$0x1]
      %s51 = scalar_lea.vmem [#allocation7], %s36
      %52 = vst [vmem:[%s51] sm:$0x1] %v50
    $region14: #{tpu_custom_call.1} parent=1 // loop_footer
      %s40 = sadd.s32 1, %s36
    $region15: #{tpu_custom_call.1} parent=1 // loop_footer_branch
      %35 = sbr.rel target = $region11
    $region16: #{tpu_custom_call.1} parent=1 // loop_exit
      _
    // Predicated region
    $region17: #{tpu_custom_call.1} parent=1 // pred_check
      _
    $region18: #{tpu_custom_call.1} parent=1 // pred_check_branch
      %54 = sbr.rel (0) target = $region20
    $region19: #{tpu_custom_call.1} parent=1 // pred_region
      %56 = vsyncadd [#allocation6], 0
      %s58 = sshll.u32 [#allocation7], 4
      %s59 = int_to_ptr.vmem [resolvable:$true] %s58
      %s60 = sshll.u32 %s2, 4
      %s61 = int_to_ptr.hbm [resolvable:$true] %s60
      %63 = dma.vmem_to_hbm [thread:$0]  %s59, 128, %s61, [#allocation6]
    $region20: #{tpu_custom_call.1} parent=1 // pred_fallthru
      _
    // Predicated region
    $region21: #{tpu_custom_call.1} parent=1 // pred_check
      _
    $region22: #{tpu_custom_call.1} parent=1 // pred_check_branch
      %65 = sbr.rel (0) target = $region24
    $region23: #{tpu_custom_call.1} parent=1 // pred_region
      %67 = dma.done [#allocation6], 128
    $region24: #{tpu_custom_call.1} parent=1 // pred_fallthru
      _
    %68 = vsyncpa [#allocation5], 1
    %69 = vsyncpa [#allocation6], 1

// kernel: tpu_custom_call.1
$region0: #{tpu_custom_call.1}
  #allocation0 [shape = 'u32[]', space=smem, size = 0x4, offset = 0x4, fixed_abs, tag = 'smem constant byte address 0x4 - core index']
  #allocation1 [shape = 'u32[72,128]{1,0:T(1,128)}', space=vmem, size = 0x9000, scoped, tag = 'internal scratch']
  %s0 = inlined_call_operand.vmem [shape: s32[8,1], index: 0, kind: input, shape index: {}]
  %s1 = inlined_call_operand.hbm [shape: f32[16,128], index: 1, kind: input, shape index: {}]
  %s2 = inlined_call_operand.hbm [shape: f32[8,128], index: 2, kind: output, shape index: {}]
  %s3 = sld [smem:[#allocation0]]
  $region22: #{tpu_custom_call.1} parent=0
    _
  %s5 = ssub.s32 1, %s3
  %s6 = scalar_select 0, %s5, %s3
  $region1: #{tpu_custom_call.1} parent=0
    #allocation2 [shape = 'u8[8192]{0}', space=vmem, size = 0x2000, scoped, tag = 'input window, operand 1, single buffered']
    #allocation3 [shape = 's32[1]{0}', space=sflag, size = 0x4, scoped, tag = 'scoped memory for tpu_custom_call.1']
    #allocation4 [shape = 's32[1]{0}', space=sflag, size = 0x4, scoped, tag = 'scoped memory for tpu_custom_call.1']
    #allocation5 [shape = 'u8[4096]{0}', space=vmem, size = 0x1000, scoped, tag = 'output window, operand 0, single buffered']
    %7 = vsyncpa [#allocation3], 0
    %8 = vsyncpa [#allocation4], 0
    // Predicated region
    $region2: #{tpu_custom_call.1} parent=1 // pred_check
      _
    $region3: #{tpu_custom_call.1} parent=1 // pred_check_branch
      %10 = sbr.rel (0) target = $region5
    $region4: #{tpu_custom_call.1} parent=1 // pred_region
      _
    $region5: #{tpu_custom_call.1} parent=1 // pred_fallthru
      _
    // Predicated region
    $region6: #{tpu_custom_call.1} parent=1 // pred_check
      _
    $region7: #{tpu_custom_call.1} parent=1 // pred_check_branch
      %12 = sbr.rel (0) target = $region9
    $region8: #{tpu_custom_call.1} parent=1 // pred_region
      %14 = vsyncadd [#allocation3], 0
      %s15 = sshll.u32 %s1, 4
      %s16 = int_to_ptr.hbm [resolvable:$true] %s15
      %s17 = sshll.u32 [#allocation2], 4
      %s18 = int_to_ptr.vmem [resolvable:$true] %s17
      %23 = dma.hbm_to_vmem [thread:$0]  %s16, 256, %s18, [#allocation3], 128, 128, 8
    $region9: #{tpu_custom_call.1} parent=1 // pred_fallthru
      _
    // Predicated region
    $region10: #{tpu_custom_call.1} parent=1 // pred_check
      _
    $region11: #{tpu_custom_call.1} parent=1 // pred_check_branch
      %25 = sbr.rel (0) target = $region13
    $region12: #{tpu_custom_call.1} parent=1 // pred_region
      %27 = dma.done [#allocation3], 256
    $region13: #{tpu_custom_call.1} parent=1 // pred_fallthru
      _
    %v28 = vld [vmem:[%s0] sm:$0xff]
    %v29 = vlaneseq
    %v30 = vand.u32 %v29, 127
    %31 = vset.pattern.permute.xlu0 0
    %32 = vperm.xlu0 %31, %v28
    %v33 = vpop.permute.xlu0 %32
    %vm34 = vcmp.eq.s32.totalorder %v30, %v33
    %v35 = vsel %vm34, 1, 0
    %v36 = vcvt.s32.f32 %v35
    %v37 = vld [vmem:[#allocation2] sm:$0xff]
    %v38 = vld [vmem:[#allocation2 + $0x8] sm:$0xff]
    %vm39 = vcmask 130048
    %v41 = vsel %vm39, %v36, 0
    %43 = vmatpush.msra.mxu0 0.0
    %44 = vmatpush.msra.mxu0 0.0
    %45 = vmatpush.msra.mxu0 0.0
    %46 = vmatpush.msra.mxu0 0.0
    %47 = vmatpush.msra.mxu0 0.0
    %48 = vmatpush.msra.mxu0 0.0
    %49 = vmatpush.msra.mxu0 0.0
    %50 = vmatpush.msra.mxu0 0.0
    %51 = vmatpush.msra.mxu0 0.0
    %52 = vmatpush.msra.mxu0 0.0
    %53 = vmatpush.msra.mxu0 0.0
    %54 = vmatpush.msra.mxu0 0.0
    %55 = vmatpush.msra.mxu0 0.0
    %56 = vmatpush.msra.mxu0 0.0
    %v57 = vand.u32 %v38, 4294901760
    %58 = vmatpush.msra.mxu0 %v57
    %v59 = vand.u32 %v37, 4294901760
    %60 = vmatpush.msra.mxu0 %v59
    %v61 = vand.u32 %v41, 4294901760
    %v62 = vsub.f32 %v41, %v61
    %v63 = vand.u32 %v62, 4294901760
    %v64 = vsub.f32 %v62, %v63
    %v65 = vand.u32 %v64, 4294901760
    %66 = vmatmul.f32.gmra.mxu0 %v65
    %v67 = vpop.f32.mrf.mxu0
    %v68 = vadd.f32 0.0, %v67
    %69 = vdwg.mxu0
    %70 = vmatpush.msra.mxu0 0.0
    %71 = vmatpush.msra.mxu0 0.0
    %72 = vmatpush.msra.mxu0 0.0
    %73 = vmatpush.msra.mxu0 0.0
    %74 = vmatpush.msra.mxu0 0.0
    %75 = vmatpush.msra.mxu0 0.0
    %76 = vmatpush.msra.mxu0 0.0
    %77 = vmatpush.msra.mxu0 0.0
    %78 = vmatpush.msra.mxu0 0.0
    %79 = vmatpush.msra.mxu0 0.0
    %80 = vmatpush.msra.mxu0 0.0
    %81 = vmatpush.msra.mxu0 0.0
    %82 = vmatpush.msra.mxu0 0.0
    %83 = vmatpush.msra.mxu0 0.0
    %v84 = vand.u32 %v38, 4294901760
    %v85 = vsub.f32 %v38, %v84
    %v86 = vand.u32 %v85, 4294901760
    %v87 = vsub.f32 %v85, %v86
    %v88 = vand.u32 %v87, 4294901760
    %89 = vmatpush.msra.mxu0 %v88
    %v90 = vand.u32 %v37, 4294901760
    %v91 = vsub.f32 %v37, %v90
    %v92 = vand.u32 %v91, 4294901760
    %v93 = vsub.f32 %v91, %v92
    %v94 = vand.u32 %v93, 4294901760
    %95 = vmatpush.msra.mxu0 %v94
    %v96 = vand.u32 %v41, 4294901760
    %97 = vmatmul.f32.gmra.mxu0 %v96
    %v98 = vpop.f32.mrf.mxu0
    %v99 = vadd.f32 %v68, %v98
    %100 = vdwg.mxu0
    %101 = vmatpush.msra.mxu0 0.0
    %102 = vmatpush.msra.mxu0 0.0
    %103 = vmatpush.msra.mxu0 0.0
    %104 = vmatpush.msra.mxu0 0.0
    %105 = vmatpush.msra.mxu0 0.0
    %106 = vmatpush.msra.mxu0 0.0
    %107 = vmatpush.msra.mxu0 0.0
    %108 = vmatpush.msra.mxu0 0.0
    %109 = vmatpush.msra.mxu0 0.0
    %110 = vmatpush.msra.mxu0 0.0
    %111 = vmatpush.msra.mxu0 0.0
    %112 = vmatpush.msra.mxu0 0.0
    %113 = vmatpush.msra.mxu0 0.0
    %114 = vmatpush.msra.mxu0 0.0
    %v115 = vand.u32 %v38, 4294901760
    %v116 = vsub.f32 %v38, %v115
    %117 = vmatpush.msra.mxu0 %v116
    %v118 = vand.u32 %v37, 4294901760
    %v119 = vsub.f32 %v37, %v118
    %120 = vmatpush.msra.mxu0 %v119
    %v121 = vand.u32 %v41, 4294901760
    %v122 = vsub.f32 %v41, %v121
    %123 = vmatmul.f32.gmra.mxu0 %v122
    %v124 = vpop.f32.mrf.mxu0
    %v125 = vadd.f32 %v99, %v124
    %126 = vdwg.mxu0
    %127 = vmatpush.msra.mxu0 0.0
    %128 = vmatpush.msra.mxu0 0.0
    %129 = vmatpush.msra.mxu0 0.0
    %130 = vmatpush.msra.mxu0 0.0
    %131 = vmatpush.msra.mxu0 0.0
    %132 = vmatpush.msra.mxu0 0.0
    %133 = vmatpush.msra.mxu0 0.0
    %134 = vmatpush.msra.mxu0 0.0
    %135 = vmatpush.msra.mxu0 0.0
    %136 = vmatpush.msra.mxu0 0.0
    %137 = vmatpush.msra.mxu0 0.0
    %138 = vmatpush.msra.mxu0 0.0
    %139 = vmatpush.msra.mxu0 0.0
    %140 = vmatpush.msra.mxu0 0.0
    %v141 = vand.u32 %v38, 4294901760
    %142 = vmatpush.msra.mxu0 %v141
    %v143 = vand.u32 %v37, 4294901760
    %144 = vmatpush.msra.mxu0 %v143
    %v145 = vand.u32 %v41, 4294901760
    %v146 = vsub.f32 %v41, %v145
    %v147 = vand.u32 %v146, 4294901760
    %148 = vmatmul.f32.gmra.mxu0 %v147
    %v149 = vpop.f32.mrf.mxu0
    %v150 = vadd.f32 %v125, %v149
    %151 = vdwg.mxu0
    %152 = vmatpush.msra.mxu0 0.0
    %153 = vmatpush.msra.mxu0 0.0
    %154 = vmatpush.msra.mxu0 0.0
    %155 = vmatpush.msra.mxu0 0.0
    %156 = vmatpush.msra.mxu0 0.0
    %157 = vmatpush.msra.mxu0 0.0
    %158 = vmatpush.msra.mxu0 0.0
    %159 = vmatpush.msra.mxu0 0.0
    %160 = vmatpush.msra.mxu0 0.0
    %161 = vmatpush.msra.mxu0 0.0
    %162 = vmatpush.msra.mxu0 0.0
    %163 = vmatpush.msra.mxu0 0.0
    %164 = vmatpush.msra.mxu0 0.0
    %165 = vmatpush.msra.mxu0 0.0
    %v166 = vand.u32 %v38, 4294901760
    %v167 = vsub.f32 %v38, %v166
    %v168 = vand.u32 %v167, 4294901760
    %169 = vmatpush.msra.mxu0 %v168
    %v170 = vand.u32 %v37, 4294901760
    %v171 = vsub.f32 %v37, %v170
    %v172 = vand.u32 %v171, 4294901760
    %173 = vmatpush.msra.mxu0 %v172
    %v174 = vand.u32 %v41, 4294901760
    %175 = vmatmul.f32.gmra.mxu0 %v174
    %v176 = vpop.f32.mrf.mxu0
    %v177 = vadd.f32 %v150, %v176
    %178 = vdwg.mxu0
    %179 = vmatpush.msra.mxu0 0.0
    %180 = vmatpush.msra.mxu0 0.0
    %181 = vmatpush.msra.mxu0 0.0
    %182 = vmatpush.msra.mxu0 0.0
    %183 = vmatpush.msra.mxu0 0.0
    %184 = vmatpush.msra.mxu0 0.0
    %185 = vmatpush.msra.mxu0 0.0
    %186 = vmatpush.msra.mxu0 0.0
    %187 = vmatpush.msra.mxu0 0.0
    %188 = vmatpush.msra.mxu0 0.0
    %189 = vmatpush.msra.mxu0 0.0
    %190 = vmatpush.msra.mxu0 0.0
    %191 = vmatpush.msra.mxu0 0.0
    %192 = vmatpush.msra.mxu0 0.0
    %v193 = vand.u32 %v38, 4294901760
    %194 = vmatpush.msra.mxu0 %v193
    %v195 = vand.u32 %v37, 4294901760
    %196 = vmatpush.msra.mxu0 %v195
    %v197 = vand.u32 %v41, 4294901760
    %198 = vmatmul.f32.gmra.mxu0 %v197
    %v199 = vpop.f32.mrf.mxu0
    %v200 = vadd.f32 %v177, %v199
    %201 = vdwg.mxu0
    %202 = vst [vmem:[#allocation5] sm:$0xff] %v200
    // Predicated region
    $region14: #{tpu_custom_call.1} parent=1 // pred_check
      _
    $region15: #{tpu_custom_call.1} parent=1 // pred_check_branch
      %204 = sbr.rel (0) target = $region17
    $region16: #{tpu_custom_call.1} parent=1 // pred_region
      %206 = vsyncadd [#allocation4], 0
      %s208 = sshll.u32 [#allocation5], 4
      %s209 = int_to_ptr.vmem [resolvable:$true] %s208
      %s210 = sshll.u32 %s2, 4
      %s211 = int_to_ptr.hbm [resolvable:$true] %s210
      %213 = dma.vmem_to_hbm [thread:$0]  %s209, 128, %s211, [#allocation4]
    $region17: #{tpu_custom_call.1} parent=1 // pred_fallthru
      _
    // Predicated region
    $region18: #{tpu_custom_call.1} parent=1 // pred_check
      _
    $region19: #{tpu_custom_call.1} parent=1 // pred_check_branch
      %215 = sbr.rel (0) target = $region21
    $region20: #{tpu_custom_call.1} parent=1 // pred_region
      %217 = dma.done [#allocation4], 128
    $region21: #{tpu_custom_call.1} parent=1 // pred_fallthru
      _
    %218 = vsyncpa [#allocation3], 1
    %219 = vsyncpa [#allocation4], 1

</llo_original>
